<compile_context>
chip_gen: v7x
topology: tpu7x:2x2x1
jax: 0.10.0
libtpu: 0.0.40
codegen_flags: <defaults>
</compile_context>

<pallas_src>
import jax
import jax.numpy as jnp
from jax.experimental import pallas as pl
from jax.experimental.pallas import tpu as pltpu


# ---------------------------------------------------------------------------
# Pallas kernel: K-tiled projection matmul + bias, f32 accumulate, bf16 store
# ---------------------------------------------------------------------------
def tubelet_proj_kernel(x_ref, w_ref, b_ref, o_ref, acc_ref):
    # x_ref: (tm, tk) bf16   w_ref: (tk, E_pad) bf16   b_ref: (1, E_pad) f32
    # o_ref: (tm, E_pad) bf16   acc_ref: (tm, E_pad) f32 scratch
    k = pl.program_id(1)

    @pl.when(k == 0)
    def _():
        acc_ref[...] = jnp.zeros_like(acc_ref)

    acc_ref[...] += jnp.dot(x_ref[...], w_ref[...],
                            preferred_element_type=jnp.float32)

    @pl.when(k == pl.num_programs(1) - 1)
    def _():
        o_ref[...] = (acc_ref[...] + b_ref[...]).astype(o_ref.dtype)


# ---------------------------------------------------------------------------
# Tiling / budgeting helpers
# ---------------------------------------------------------------------------
def _round_up(x, m):
    return (x + m - 1) // m * m


def _vmem_capacity_bytes():
    """Generation-aware VMEM capacity (64 MiB/TC on v7x, 128 MiB on v5e/v6e)."""
    try:
        return int(pltpu.get_tpu_info().vmem_capacity_bytes)
    except Exception:
        return 64 * 2**20  # conservative fallback (v7x per-TC size)


def choose_tiles(M, K, E_pad, budget_bytes, single_buffer_w):
    """Pick (tm, tk, k_steps) so the double-buffered working set fits the budget.

    Preference order for tm (per review): divides M exactly (no pad, no slice
    copy) > at least 2 grid steps > even step count (v7x 2-TC balance) > larger
    tile (amortize per-step overhead)."""

    def fits(tm, tk, k_steps):
        w_bufs = 1 if (k_steps == 1 and single_buffer_w) else 2
        x_b = 2 * tm * tk * 2            # double-buffered bf16 activations
        w_b = w_bufs * tk * E_pad * 2    # bf16 weight
        o_b = 2 * tm * E_pad * 2         # double-buffered bf16 output
        a_b = tm * E_pad * 4             # f32 accumulator scratch
        b_b = 2 * E_pad * 4              # bias
        return x_b + w_b + o_b + a_b + b_b <= budget_bytes

    # K tiling: single K step whenever the full (K, E_pad) weight fits.
    if fits(16, K, 1):
        tk, k_steps = K, 1
    else:
        tk = 256
        while tk * 2 < K and fits(128, tk * 2, -(-K // (tk * 2))):
            tk *= 2
        k_steps = -(-K // tk)

    m_cap = _round_up(max(M, 1), 16)
    tm_cands = [t for t in (2048, 1024, 512, 256, 128, 64, 32, 16)
                if t <= m_cap and fits(t, tk, k_steps)]
    if not tm_cands:
        tm_cands = [16]

    def key(tm):
        steps = -(-M // tm)
        return (M % tm == 0, steps >= 2, steps % 2 == 0, tm)

    tm = max(tm_cands, key=key)
    return tm, tk, k_steps


# ---------------------------------------------------------------------------
# Projection wrapper
# ---------------------------------------------------------------------------
def tubelet_projection(patches, weight_ke, bias, *, out_dtype=jnp.bfloat16,
                       single_buffer_const_inputs=True):
    """patches: (M, K), weight_ke: (K, E), bias: (E,) -> (M, E) out_dtype."""
    M, K = patches.shape
    _, E = weight_ke.shape

    # Lane-dense output: pad embed dim only when not already a multiple of 128.
    E_pad = _round_up(E, 128)
    if E_pad != E:
        weight_ke = jnp.pad(weight_ke, ((0, 0), (0, E_pad - E)))
        bias = jnp.pad(bias, (0, E_pad - E))

    patches_bf = patches.astype(jnp.bfloat16)
    weight_bf = weight_ke.astype(jnp.bfloat16)
    bias2d = bias.astype(jnp.float32).reshape(1, E_pad)

    vmem_cap = _vmem_capacity_bytes()
    vmem_limit = min(int(vmem_cap * 0.625), 96 * 2**20)   # ~40 MiB v7x, 80 MiB v5e/v6e
    tile_budget = int(vmem_limit * 0.7)                    # headroom for compiler scratch

    tm, tk, k_steps = choose_tiles(M, K, E_pad, tile_budget,
                                   single_buffer_const_inputs)

    M_pad = _round_up(M, tm)
    if M_pad != M:
        patches_bf = jnp.pad(patches_bf, ((0, M_pad - M), (0, 0)))
    K_pad = tk * k_steps
    if K_pad != K:
        patches_bf = jnp.pad(patches_bf, ((0, 0), (0, K_pad - K)))
        weight_bf = jnp.pad(weight_bf, ((0, K_pad - K), (0, 0)))

    m_steps = M_pad // tm
    grid = (m_steps, k_steps)

    # Single-buffer the grid-invariant weight (when K untiled) and bias.
    const_kwargs = {}
    if single_buffer_const_inputs and hasattr(pl, "Buffered"):
        const_kwargs = dict(pipeline_mode=pl.Buffered(1))
    w_kwargs = const_kwargs if k_steps == 1 else {}

    cost = pl.CostEstimate(
        flops=2 * M_pad * K_pad * E_pad,
        transcendentals=0,
        bytes_accessed=(M_pad * K_pad * 2
                        + K_pad * E_pad * 2 * (m_steps if k_steps > 1 else 1)
                        + M_pad * E_pad * 2 + E_pad * 4),
    )

    out = pl.pallas_call(
        tubelet_proj_kernel,
        out_shape=jax.ShapeDtypeStruct((M_pad, E_pad), jnp.bfloat16),
        grid_spec=pltpu.PrefetchScalarGridSpec(
            num_scalar_prefetch=0,
            grid=grid,
            in_specs=[
                pl.BlockSpec((tm, tk), lambda i, k: (i, k)),
                pl.BlockSpec((tk, E_pad), lambda i, k: (k, 0), **w_kwargs),
                pl.BlockSpec((1, E_pad), lambda i, k: (0, 0), **const_kwargs),
            ],
            out_specs=pl.BlockSpec((tm, E_pad), lambda i, k: (i, 0)),
            scratch_shapes=[pltpu.VMEM((tm, E_pad), jnp.float32)],
        ),
        compiler_params=pltpu.CompilerParams(
            dimension_semantics=("parallel", "arbitrary"),
            vmem_limit_bytes=vmem_limit,
        ),
        cost_estimate=cost,
    )(patches_bf, weight_bf, bias2d)

    if M_pad != M or E_pad != E:
        out = out[:M, :E]
    return out.astype(out_dtype)


# ---------------------------------------------------------------------------
# Glue: patch extraction (lane-friendly, single fused pass) + module wrapper
# ---------------------------------------------------------------------------
def extract_tubelet_patches(x, patch_size):
    """x: (B, T, H, W, C) -> (B*nT*nH*nW, pt*ph*pw*C).

    Patches are flattened in (pt, ph, pw, C) order so the channel dim stays in
    the fast (lane) dimension; the tiny Conv3d weight is permuted to match
    instead of re-laying-out the much larger activation tensor."""
    B, T, H, W, C = x.shape
    pt, ph, pw = patch_size
    nT, nH, nW = T // pt, H // ph, W // pw
    x = x.reshape(B, nT, pt, nH, ph, nW, pw, C)
    x = x.transpose(0, 1, 3, 5, 2, 4, 6, 7)   # (B, nT, nH, nW, pt, ph, pw, C)
    return x.reshape(B * nT * nH * nW, pt * ph * pw * C), (B, nT * nH * nW)


class TubeletEmbeddingPallas:
    """Pallas TPU port of TubeletEmbedding (Conv3d, kernel==stride, 'valid').

    Note: activations/weights are cast to bf16 and the output is emitted in
    bf16 (f32 MXU accumulation in-kernel) — a deliberate precision/bandwidth
    trade vs. the f32 PyTorch Conv3d. Pass out_dtype=jnp.float32 for f32 output
    (costs an extra cast pass)."""

    def __init__(self, seq_size=(10, 256, 256), patch_size=(4, 16, 16),
                 in_chans=1, embed_dim=128, *, key, out_dtype=jnp.bfloat16):
        self.seq_size = seq_size
        self.patch_size = patch_size
        self.in_chans = in_chans
        self.embed_dim = embed_dim
        self.out_dtype = out_dtype
        self.single_buffer_const_inputs = True
        self.num_patches = (seq_size[0] // patch_size[0]
                            * (seq_size[1] // patch_size[1])
                            * (seq_size[2] // patch_size[2]))
        pt, ph, pw = patch_size
        fan_in = in_chans * pt * ph * pw
        kw_key, b_key = jax.random.split(key)
        bound = 1.0 / (fan_in ** 0.5)
        # Conv3d weight layout: (embed_dim, in_chans, kt, kh, kw)
        self.weight = jax.random.uniform(
            kw_key, (embed_dim, in_chans, pt, ph, pw),
            dtype=jnp.float32, minval=-bound, maxval=bound)
        self.bias = jax.random.uniform(
            b_key, (embed_dim,), dtype=jnp.float32, minval=-bound, maxval=bound)
        # (K, E) with K ordered (kt, kh, kw, C) to match the patch flatten order.
        self.weight_ke = jnp.transpose(self.weight, (2, 3, 4, 1, 0)).reshape(
            fan_in, embed_dim)

    def __call__(self, x):
        # x: (B, T, H, W, C).  Cast before the (lane-preserving) patch transpose
        # so XLA fuses the convert into the single rearrangement pass: one f32
        # HBM read of x, one bf16 write of the patch matrix.
        patches, (B, npp) = extract_tubelet_patches(
            x.astype(jnp.bfloat16), self.patch_size)
        out = tubelet_projection(
            patches, self.weight_ke, self.bias,
            out_dtype=self.out_dtype,
            single_buffer_const_inputs=self.single_buffer_const_inputs)
        return out.reshape(B, npp, self.embed_dim)


# ---------------------------------------------------------------------------
# Pure-JAX f32 reference (mirrors the PyTorch Conv3d semantics)
# ---------------------------------------------------------------------------
def reference_forward(x, weight, bias, patch_size, embed_dim):
    patches, (B, npp) = extract_tubelet_patches(x, patch_size)
    w_ke = jnp.transpose(weight, (2, 3, 4, 1, 0)).reshape(-1, embed_dim)
    out = patches @ w_ke + bias[None, :]
    return out.reshape(B, npp, embed_dim)


if __name__ == "__main__":
    # Small, module-consistent shapes: batch=2, seq=8, spatial=16, channels=4,
    # hidden=32.  M = B*num_patches = 64, K = 4*4*4*4 = 256 (multiple of 128).
    seq_size = (8, 16, 16)      # (T, H, W)
    patch_size = (4, 4, 4)
    in_chans = 4
    embed_dim = 32
    B = 2

    key = jax.random.PRNGKey(0)
    x_key, p_key = jax.random.split(key)
    x = jax.random.normal(
        x_key, (B, seq_size[0], seq_size[1], seq_size[2], in_chans),
        dtype=jnp.float32)

    model = TubeletEmbeddingPallas(seq_size, patch_size, in_chans, embed_dim,
                                   key=p_key)

    forward = jax.jit(model.__call__)
    try:
        out = jax.block_until_ready(forward(x))
    except Exception:
        # pl.Buffered(1) single-buffering of the grid-invariant weight/bias is a
        # v7x VMEM optimization; fall back to default double buffering if this
        # jax/libtpu build rejects it.
        model.single_buffer_const_inputs = False
        forward = jax.jit(model.__call__)
        out = jax.block_until_ready(forward(x))

    # Sanity check vs. pure-JAX f32 Conv3d semantics (tolerance covers bf16
    # operands + bf16 output with f32 accumulation).
    ref = reference_forward(x, model.weight, model.bias, patch_size, embed_dim)
    assert out.shape == (B, model.num_patches, embed_dim), out.shape
    assert jnp.allclose(out.astype(jnp.float32), ref, atol=2e-2, rtol=2e-2), \
        "mismatch vs reference"

    print("KERNEL_OK")
</pallas_src>

<mosaic_0001>
module attributes {stable_mosaic.version = 11 : i64} {
  func.func @tubelet_proj_kernel(%arg0: i32, %arg1: i32, %arg2: memref<32x256xbf16, #tpu.memory_space<vmem>>, %arg3: memref<256x128xbf16, #tpu.memory_space<vmem>>, %arg4: memref<1x128xf32, #tpu.memory_space<vmem>>, %arg5: memref<32x128xbf16, #tpu.memory_space<vmem>>, %arg6: memref<32x128xf32, #tpu.memory_space<vmem>>) attributes {dimension_semantics = [#tpu.dimension_semantics<parallel>, #tpu.dimension_semantics<arbitrary>], iteration_bounds = array<i64: 2, 1>, scalar_prefetch = 0 : i64, scratch_operands = 1 : i64, tpu.core_type = #tpu.core_type<tc>, window_params = [{transform_indices = @transform_0, window_bounds = array<i64: 32, 256>}, {pipeline_mode = #tpu.pipeline_mode<synchronous>, transform_indices = @transform_1, window_bounds = array<i64: 256, 128>}, {pipeline_mode = #tpu.pipeline_mode<synchronous>, transform_indices = @transform_2, window_bounds = array<i64: 1, 128>}, {transform_indices = @transform_3, window_bounds = array<i64: 32, 128>}]} {
    %c0_i32 = arith.constant 0 : i32
    %0 = arith.cmpi eq, %arg1, %c0_i32 : i32
    %1 = arith.extui %0 : i1 to i32
    %c0_i32_0 = arith.constant 0 : i32
    %2 = arith.cmpi ne, %1, %c0_i32_0 : i32
    scf.if %2 {
      %cst_10 = arith.constant 0.000000e+00 : f32
      %12 = vector.broadcast %cst_10 : f32 to vector<32x128xf32>
      %c0_11 = arith.constant 0 : index
      %c0_12 = arith.constant 0 : index
      %13 = vector.load %arg6[%c0_11, %c0_12] : memref<32x128xf32, #tpu.memory_space<vmem>>, vector<32x128xf32>
      tpu.vector_store %arg6[%c0_11, %c0_12], %12 {strides = array<i32>} : memref<32x128xf32, #tpu.memory_space<vmem>>, vector<32x128xf32>,
    } else {
    }
    %c0 = arith.constant 0 : index
    %c0_1 = arith.constant 0 : index
    %3 = vector.load %arg6[%c0, %c0_1] : memref<32x128xf32, #tpu.memory_space<vmem>>, vector<32x128xf32>
    %c0_2 = arith.constant 0 : index
    %c0_3 = arith.constant 0 : index
    %4 = vector.load %arg2[%c0_2, %c0_3] : memref<32x256xbf16, #tpu.memory_space<vmem>>, vector<32x256xbf16>
    %c0_4 = arith.constant 0 : index
    %c0_5 = arith.constant 0 : index
    %5 = vector.load %arg3[%c0_4, %c0_5] : memref<256x128xbf16, #tpu.memory_space<vmem>>, vector<256x128xbf16>
    %cst = arith.constant dense<0.000000e+00> : vector<32x128xf32>
    %6 = tpu.matmul %4, %5, %cst {dimension_numbers = #tpu.dot_dimension_numbers<[1], [0], [0], [1], [0, 0, 1, 1], [], []>} : vector<32x256xbf16>, vector<256x128xbf16>, vector<32x128xf32> -> vector<32x128xf32>
    %7 = arith.addf %3, %6 : vector<32x128xf32>
    %c0_6 = arith.constant 0 : index
    %c0_7 = arith.constant 0 : index
    %8 = vector.load %arg6[%c0_6, %c0_7] : memref<32x128xf32, #tpu.memory_space<vmem>>, vector<32x128xf32>
    tpu.vector_store %arg6[%c0_6, %c0_7], %7 {strides = array<i32>} : memref<32x128xf32, #tpu.memory_space<vmem>>, vector<32x128xf32>,
    %c0_i32_8 = arith.constant 0 : i32
    %9 = arith.cmpi eq, %arg1, %c0_i32_8 : i32
    %10 = arith.extui %9 : i1 to i32
    %c0_i32_9 = arith.constant 0 : i32
    %11 = arith.cmpi ne, %10, %c0_i32_9 : i32
    scf.if %11 {
      %c0_10 = arith.constant 0 : index
      %c0_11 = arith.constant 0 : index
      %12 = vector.load %arg6[%c0_10, %c0_11] : memref<32x128xf32, #tpu.memory_space<vmem>>, vector<32x128xf32>
      %c0_12 = arith.constant 0 : index
      %c0_13 = arith.constant 0 : index
      %13 = vector.load %arg4[%c0_12, %c0_13] : memref<1x128xf32, #tpu.memory_space<vmem>>, vector<1x128xf32>
      %14 = vector.broadcast %13 : vector<1x128xf32> to vector<32x128xf32>
      %15 = arith.addf %12, %14 : vector<32x128xf32>
      %16 = arith.truncf %15 : vector<32x128xf32> to vector<32x128xbf16>
      %c0_14 = arith.constant 0 : index
      %c0_15 = arith.constant 0 : index
      %17 = vector.load %arg5[%c0_14, %c0_15] : memref<32x128xbf16, #tpu.memory_space<vmem>>, vector<32x128xbf16>
      tpu.vector_store %arg5[%c0_14, %c0_15], %16 {strides = array<i32>} : memref<32x128xbf16, #tpu.memory_space<vmem>>, vector<32x128xbf16>,
    } else {
    }
    return
  }
  func.func @transform_0(%arg0: i32, %arg1: i32) -> (i32, i32) {
    %c0_i32 = arith.constant 0 : i32
    return %arg0, %arg1 : i32, i32
  }
  func.func @transform_1(%arg0: i32, %arg1: i32) -> (i32, i32) {
    %c0_i32 = arith.constant 0 : i32
    %c0_i32_0 = arith.constant 0 : i32
    return %arg1, %c0_i32 : i32, i32
  }
  func.func @transform_2(%arg0: i32, %arg1: i32) -> (i32, i32) {
    %c0_i32 = arith.constant 0 : i32
    %c0_i32_0 = arith.constant 0 : i32
    %c0_i32_1 = arith.constant 0 : i32
    return %c0_i32, %c0_i32_0 : i32, i32
  }
  func.func @transform_3(%arg0: i32, %arg1: i32) -> (i32, i32) {
    %c0_i32 = arith.constant 0 : i32
    %c0_i32_0 = arith.constant 0 : i32
    return %arg0, %c0_i32 : i32, i32
  }
}

</mosaic_0001>

<llo_original>
// kernel: a_call__.1
$region0: #{a_call__.1}
  #allocation0 [shape = 'u32[]', space=smem, size = 0x4, offset = 0x4, fixed_abs, tag = 'smem constant byte address 0x4 - core index']
  #allocation1 [shape = 'u32[144,128]{1,0:T(1,128)}', space=vmem, size = 0x12000, scoped, tag = 'internal scratch']
  #allocation2 [shape = 'f32[32,128]{1,0:T(8,128)}', space=vmem, size = 0x4000, scoped, tag = 'scratch operand']
  %s0 = inlined_call_operand.vmem [shape: bf16[64,256], index: 0, kind: input, shape index: {}]
  %s1 = inlined_call_operand.vmem [shape: bf16[256,128], index: 1, kind: input, shape index: {}]
  %s2 = inlined_call_operand.vmem [shape: f32[1,128], index: 2, kind: input, shape index: {}]
  %s3 = inlined_call_operand.hbm [shape: bf16[64,128], index: 3, kind: output, shape index: {}]
  %s4 = sld [smem:[#allocation0]]
  $region53: #{a_call__.1} parent=0
    _
  %s6 = ssub.s32 1, %s4
  %s7 = scalar_select 0, %s6, %s4
  $region1: #{a_call__.1} parent=0
    #allocation3 [shape = 'u8[16384]{0}', space=vmem, size = 0x4000, scoped, tag = 'output window, operand 0']
    #allocation4 [shape = 's32[2]{0}', space=sflag, size = 0x8, scoped, tag = 'scoped memory for a_call__.1']
    %8 = vsyncpa [#allocation4], 0
    %s9 = scalar_lea.sflag [#allocation4], 1
    %10 = vsyncpa %s9, 0
    loop: start=0, step=1, limit=4
    $region2: #{a_call__.1} parent=1 // loop_pre_header
      _
    $region3: #{a_call__.1} parent=1 // loop_header
      %s12 = sphi 0, %s16
      %p13 = scmp.ge.s32.totalorder %s12, 4
      %s19 = sphi 0, %s31
      %s20 = sphi 0, %s27
      %s21 = sphi 0, %s19
      %s22 = sphi 0, %s20
      %s23 = sphi 0, %s21
      %s24 = sphi 0, %s22
      %s36 = sphi 0, %s38
      %s39 = sphi 0, %s36
      %s40 = sphi 0, %s39
      %s56 = sphi 0, %s40
      %s62 = sphi 0, %s64
      %s65 = sphi 0, %s62
      %s66 = sphi 0, %s65
      %s82 = sphi 0, %s66
      %s86 = sphi 0, %s86
      %s88 = sphi 0, %s86
      %s89 = sphi 0, %s88
      %s103 = sphi 0, %s89
      %s109 = sphi 0, %s111
      %s112 = sphi 0, %s109
      %s113 = sphi 0, %s112
      %s129 = sphi 0, %s113
    $region4: #{a_call__.1} parent=1 // loop_header_branch
      %15 = sbr.rel (%p13) target = $region8
    $region5: #{a_call__.1} parent=1 // loop_body
      %s17 = ssub.s32 %s12, 1
      %s18 = ssub.s32 %s12, 2
      %s25 = sadd.s32 1, %s20
      %p26 = scmp.ge.s32.totalorder %s25, 1
      %s27 = scalar_select %p26, 0, %s25
      %s28 = sadd.s32 1, %s19
      %s29 = scalar_select %p26, %s28, %s19
      %p30 = scmp.ge.s32.totalorder %s29, 2
      %s31 = scalar_select %p30, 0, %s29
      %s32 = ssub.s32 %s19, %s31
      %s33 = ssub.s32 %s20, %s27
      %s34 = sor.u32 %s32, %s33
      %p35 = scmp.eq.s32.totalorder %s34, 0
      %s37 = sadd.s32 %s36, 1
      %s38 = scalar_select %p35, %s36, %s37
      %p41 = pneg %p35
      %p42 = scmp.eq.s32.totalorder %s12, 1
      %p43 = por %p41, %p42
      %p44 = scmp.ne.s32.totalorder %s36, %s39
      %p45 = scmp.eq.s32.totalorder %s12, 0
      %p46 = por %p44, %p45
      %p47 = scmp.ne.s32.totalorder %s36, %s39
      %p48 = scmp.eq.s32.totalorder %s17, 1
      %p49 = por %p47, %p48
      %p50 = scmp.ne.s32.totalorder %s39, %s40
      %p51 = scmp.eq.s32.totalorder %s17, 0
      %p52 = por %p50, %p51
      %p53 = scmp.ne.s32.totalorder %s39, %s40
      %p54 = scmp.eq.s32.totalorder %s18, 1
      %p55 = por %p53, %p54
      %p57 = scmp.ne.s32.totalorder %s40, %s56
      %p58 = scmp.eq.s32.totalorder %s18, 0
      %p59 = por %p57, %p58
      %s60 = ssub.s32 %s20, %s27
      %p61 = scmp.eq.s32.totalorder %s60, 0
      %s63 = sadd.s32 %s62, 1
      %s64 = scalar_select %p61, %s62, %s63
      %p67 = pneg %p61
      %p68 = scmp.eq.s32.totalorder %s12, 1
      %p69 = por %p67, %p68
      %p70 = scmp.ne.s32.totalorder %s62, %s65
      %p71 = scmp.eq.s32.totalorder %s12, 0
      %p72 = por %p70, %p71
      %p73 = scmp.ne.s32.totalorder %s62, %s65
      %p74 = scmp.eq.s32.totalorder %s17, 1
      %p75 = por %p73, %p74
      %p76 = scmp.ne.s32.totalorder %s65, %s66
      %p77 = scmp.eq.s32.totalorder %s17, 0
      %p78 = por %p76, %p77
      %p79 = scmp.ne.s32.totalorder %s65, %s66
      %p80 = scmp.eq.s32.totalorder %s18, 1
      %p81 = por %p79, %p80
      %p83 = scmp.ne.s32.totalorder %s66, %s82
      %p84 = scmp.eq.s32.totalorder %s18, 0
      %p85 = por %p83, %p84
      %s87 = sadd.s32 %s86, 1
      %p90 = scmp.eq.s32.totalorder %s12, 1
      %p91 = scmp.ne.s32.totalorder %s86, %s88
      %p92 = scmp.eq.s32.totalorder %s12, 0
      %p93 = por %p91, %p92
      %p94 = scmp.ne.s32.totalorder %s86, %s88
      %p95 = scmp.eq.s32.totalorder %s17, 1
      %p96 = por %p94, %p95
      %p97 = scmp.ne.s32.totalorder %s88, %s89
      %p98 = scmp.eq.s32.totalorder %s17, 0
      %p99 = por %p97, %p98
      %p100 = scmp.ne.s32.totalorder %s88, %s89
      %p101 = scmp.eq.s32.totalorder %s18, 1
      %p102 = por %p100, %p101
      %p104 = scmp.ne.s32.totalorder %s89, %s103
      %p105 = scmp.eq.s32.totalorder %s18, 0
      %p106 = por %p104, %p105
      %s107 = ssub.s32 %s19, %s31
      %p108 = scmp.eq.s32.totalorder %s107, 0
      %s110 = sadd.s32 %s109, 1
      %s111 = scalar_select %p108, %s109, %s110
      %p114 = pneg %p108
      %p115 = scmp.eq.s32.totalorder %s12, 1
      %p116 = por %p114, %p115
      %p117 = scmp.ne.s32.totalorder %s109, %s112
      %p118 = scmp.eq.s32.totalorder %s12, 0
      %p119 = por %p117, %p118
      %p120 = scmp.ne.s32.totalorder %s109, %s112
      %p121 = scmp.eq.s32.totalorder %s17, 1
      %p122 = por %p120, %p121
      %p123 = scmp.ne.s32.totalorder %s112, %s113
      %p124 = scmp.eq.s32.totalorder %s17, 0
      %p125 = por %p123, %p124
      %p126 = scmp.ne.s32.totalorder %s112, %s113
      %p127 = scmp.eq.s32.totalorder %s18, 1
      %p128 = por %p126, %p127
      %p130 = scmp.ne.s32.totalorder %s113, %s129
      %p131 = scmp.eq.s32.totalorder %s18, 0
      %p132 = por %p130, %p131
      %p133 = scmp.le.s32.totalorder 1, %s12
      %p134 = scmp.lt.s32.totalorder %s12, 3
      %p135 = pnand %p133, %p134
      %p136 = pneg %p135
      // Predicated region
      $region9: #{a_call__.1} parent=5 // pred_check
        _
      $region10: #{a_call__.1} parent=5 // pred_check_branch
        %138 = sbr.rel (%p135) target = $region12
      $region11: #{a_call__.1} parent=5 // pred_region
        %s139 = ssub.s32 %s12, 1
        // Predicated region
        $region13: #{a_call__.1} parent=11 // pred_check
          %p140 = pneg %p78
        $region14: #{a_call__.1} parent=11 // pred_check_branch
          %142 = sbr.rel (%p140) target = $region16
        $region15: #{a_call__.1} parent=11 // pred_region
          %s143 = smul.u32 32, %s22
          %p144 = scmp.lt.s32.totalorder %s143, 31
          %s145 = scalar_select %p144, %s143, 31
          %s146 = smul.addr %s145, 4
          %s147 = scalar_lea.vmem %s1, %s146
          %s148 = smul.u32 32, %s22
        $region16: #{a_call__.1} parent=11 // pred_fallthru
          _
        // Predicated region
        $region17: #{a_call__.1} parent=11 // pred_check
          %p149 = pneg %p99
        $region18: #{a_call__.1} parent=11 // pred_check_branch
          %151 = sbr.rel (%p149) target = $region20
        $region19: #{a_call__.1} parent=11 // pred_region
          _
        $region20: #{a_call__.1} parent=11 // pred_fallthru
          _
      $region12: #{a_call__.1} parent=5 // pred_fallthru
        _
      %p152 = scmp.lt.s32.totalorder %s12, 2
      // Predicated region
      $region21: #{a_call__.1} parent=5 // pred_check
        %p153 = pneg %p152
      $region22: #{a_call__.1} parent=5 // pred_check_branch
        %155 = sbr.rel (%p153) target = $region24
      $region23: #{a_call__.1} parent=5 // pred_region
        // Predicated region
        $region25: #{a_call__.1} parent=23 // pred_check
          %p156 = pneg %p46
        $region26: #{a_call__.1} parent=23 // pred_check_branch
          %158 = sbr.rel (%p156) target = $region28
        $region27: #{a_call__.1} parent=23 // pred_region
          %s159 = smul.u32 4, %s19
          %s160 = smul.u32 2, %s20
          %p161 = scmp.lt.s32.totalorder %s159, 7
          %s162 = scalar_select %p161, %s159, 7
          %p163 = scmp.lt.s32.totalorder %s160, 1
          %s164 = scalar_select %p163, %s160, 1
          %s165 = smul.addr %s162, 2
          %s166 = sadd.s32 %s164, %s165
          %s167 = smul.addr %s166, 4
          %s168 = scalar_lea.vmem %s0, %s167
          %s169 = smul.u32 4, %s19
          %s170 = smul.u32 2, %s20
        $region28: #{a_call__.1} parent=23 // pred_fallthru
          _
      $region24: #{a_call__.1} parent=5 // pred_fallthru
        _
      %p171 = scmp.le.s32.totalorder 1, %s12
      %p172 = scmp.lt.s32.totalorder %s12, 3
      %p173 = pnand %p171, %p172
      %p174 = pneg %p173
      // Predicated region
      $region29: #{a_call__.1} parent=5 // pred_check
        _
      $region30: #{a_call__.1} parent=5 // pred_check_branch
        %176 = sbr.rel (%p173) target = $region32
      $region31: #{a_call__.1} parent=5 // pred_region
        %s177 = ssub.s32 %s12, 1
        %s178 = smul.u32 4, %s21
        %s179 = smul.u32 2, %s22
        %p180 = scmp.lt.s32.totalorder %s178, 7
        %s181 = scalar_select %p180, %s178, 7
        %p182 = scmp.lt.s32.totalorder %s179, 1
        %s183 = scalar_select %p182, %s179, 1
        %s184 = smul.addr %s181, 2
        %s185 = sadd.s32 %s183, %s184
        %s186 = smul.addr %s185, 4
        %s187 = scalar_lea.vmem %s0, %s186
        %p188 = pneg %p52
        %p189 = pneg %p49
        %s190 = smul.u32 32, %s22
        %p191 = scmp.lt.s32.totalorder %s190, 31
        %s192 = scalar_select %p191, %s190, 31
        %s193 = smul.addr %s192, 4
        %s194 = scalar_lea.vmem %s1, %s193
        %p195 = pneg %p78
        %p196 = pneg %p75
        %p197 = pneg %p99
        %p198 = pneg %p96
        %p199 = pneg %p125
        %p200 = pneg %p122
        %s201 = sand.u32 %s112, 1
        %s202 = scalar_lea.sflag [#allocation4], %s201
        %s203 = sand.u32 %s112, 1
        %s204 = smul.addr %s203, 16
        %s205 = scalar_lea.vmem [#allocation3], %s204
        %s206 = smul.u32 4, %s21
        %s207 = smul.u32 2, %s22
        %p208 = scmp.lt.s32.totalorder %s206, 7
        %s209 = scalar_select %p208, %s206, 7
        %p210 = scmp.lt.s32.totalorder %s207, 1
        %s211 = scalar_select %p210, %s207, 1
        %s212 = smul.addr %s209, 2
        %s213 = sadd.s32 %s211, %s212
        %s214 = smul.addr %s213, 4
        %s215 = scalar_lea.vmem %s0, %s214
        %s216 = smul.u32 4, %s21
        %s217 = smul.u32 2, %s22
        %s218 = smul.u32 32, %s22
        %p219 = scmp.lt.s32.totalorder %s218, 31
        %s220 = scalar_select %p219, %s218, 31
        %s221 = smul.addr %s220, 4
        %s222 = scalar_lea.vmem %s1, %s221
        %s223 = smul.u32 32, %s22
        %s224 = smul.u32 4, %s21
        %p226 = scmp.eq.s32.totalorder %s22, 0
        // Predicated region
        $region33: #{a_call__.1} parent=31 // pred_check
          %p227 = pneg %p226
        $region34: #{a_call__.1} parent=31 // pred_check_branch
          %229 = sbr.rel (%p227) target = $region36
        $region35: #{a_call__.1} parent=31 // pred_region
          %230 = vst [vmem:[#allocation2] sm:$0xff] 0.0
          %231 = vst [vmem:[#allocation2 + $0x8] sm:$0xff] 0.0
          %232 = vst [vmem:[#allocation2 + $0x10] sm:$0xff] 0.0
          %233 = vst [vmem:[#allocation2 + $0x18] sm:$0xff] 0.0
        $region36: #{a_call__.1} parent=31 // pred_fallthru
          _
        %v234 = vld [vmem:[#allocation2] sm:$0xff]
        %v235 = vld [vmem:[#allocation2 + $0x8] sm:$0xff]
        %v236 = vld [vmem:[#allocation2 + $0x10] sm:$0xff]
        %v237 = vld [vmem:[#allocation2 + $0x18] sm:$0xff]
        %v238 = vld [vmem:[%s215] sm:$0xff]
        %v239 = vld [vmem:[%s215 + $0x8] sm:$0xff]
        %v240 = vld [vmem:[%s215 + $0x10] sm:$0xff]
        %v241 = vld [vmem:[%s215 + $0x18] sm:$0xff]
        %v242 = vld [vmem:[%s222] sm:$0xf]
        %v243 = vld [vmem:[%s222 + $0x4] sm:$0xf]
        %v244 = vld [vmem:[%s222 + $0x8] sm:$0xf]
        %v245 = vld [vmem:[%s222 + $0xc] sm:$0xf]
        %v246 = vld [vmem:[%s222 + $0x10] sm:$0xf]
        %v247 = vld [vmem:[%s222 + $0x14] sm:$0xf]
        %v248 = vld [vmem:[%s222 + $0x18] sm:$0xf]
        %v249 = vld [vmem:[%s222 + $0x1c] sm:$0xf]
        %v250 = vld [vmem:[%s222 + $0x20] sm:$0xf]
        %v251 = vld [vmem:[%s222 + $0x24] sm:$0xf]
        %v252 = vld [vmem:[%s222 + $0x28] sm:$0xf]
        %v253 = vld [vmem:[%s222 + $0x2c] sm:$0xf]
        %v254 = vld [vmem:[%s222 + $0x30] sm:$0xf]
        %v255 = vld [vmem:[%s222 + $0x34] sm:$0xf]
        %v256 = vld [vmem:[%s222 + $0x38] sm:$0xf]
        %v257 = vld [vmem:[%s222 + $0x3c] sm:$0xf]
        %v258 = vld [vmem:[%s222 + $0x40] sm:$0xf]
        %v259 = vld [vmem:[%s222 + $0x44] sm:$0xf]
        %v260 = vld [vmem:[%s222 + $0x48] sm:$0xf]
        %v261 = vld [vmem:[%s222 + $0x4c] sm:$0xf]
        %v262 = vld [vmem:[%s222 + $0x50] sm:$0xf]
        %v263 = vld [vmem:[%s222 + $0x54] sm:$0xf]
        %v264 = vld [vmem:[%s222 + $0x58] sm:$0xf]
        %v265 = vld [vmem:[%s222 + $0x5c] sm:$0xf]
        %v266 = vld [vmem:[%s222 + $0x60] sm:$0xf]
        %v267 = vld [vmem:[%s222 + $0x64] sm:$0xf]
        %v268 = vld [vmem:[%s222 + $0x68] sm:$0xf]
        %v269 = vld [vmem:[%s222 + $0x6c] sm:$0xf]
        %v270 = vld [vmem:[%s222 + $0x70] sm:$0xf]
        %v271 = vld [vmem:[%s222 + $0x74] sm:$0xf]
        %v272 = vld [vmem:[%s222 + $0x78] sm:$0xf]
        %v273 = vld [vmem:[%s222 + $0x7c] sm:$0xf]
        %v278 = vunpack.c.l.b16 %v238
        %v279 = vunpack.c.h.b16 %v238
        %v280 = vunpack.c.l.b16 %v239
        %v281 = vunpack.c.h.b16 %v239
        %v282 = vunpack.c.l.b16 %v240
        %v283 = vunpack.c.h.b16 %v240
        %v284 = vunpack.c.l.b16 %v241
        %v285 = vunpack.c.h.b16 %v241
        %v286 = vpack.c.b16 %v280, %v278
        %v287 = vpack.c.b16 %v281, %v279
        %v288 = vpack.c.b16 %v284, %v282
        %v289 = vpack.c.b16 %v285, %v283
        %v326 = vunpack.c.l.b16 %v242
        %v327 = vunpack.c.l.b16 %v243
        %v328 = vunpack.c.l.b16 %v244
        %v329 = vunpack.c.l.b16 %v245
        %v330 = vunpack.c.l.b16 %v246
        %v331 = vunpack.c.l.b16 %v247
        %v332 = vunpack.c.l.b16 %v248
        %v333 = vunpack.c.l.b16 %v249
        %v334 = vunpack.c.l.b16 %v250
        %v335 = vunpack.c.l.b16 %v251
        %v336 = vunpack.c.l.b16 %v252
        %v337 = vunpack.c.l.b16 %v253
        %v338 = vunpack.c.l.b16 %v254
        %v339 = vunpack.c.l.b16 %v255
        %v340 = vunpack.c.l.b16 %v256
        %v341 = vunpack.c.l.b16 %v257
        %v342 = vunpack.c.l.b16 %v258
        %v343 = vunpack.c.l.b16 %v259
        %v344 = vunpack.c.l.b16 %v260
        %v345 = vunpack.c.l.b16 %v261
        %v346 = vunpack.c.l.b16 %v262
        %v347 = vunpack.c.l.b16 %v263
        %v348 = vunpack.c.l.b16 %v264
        %v349 = vunpack.c.l.b16 %v265
        %v350 = vunpack.c.l.b16 %v266
        %v351 = vunpack.c.l.b16 %v267
        %v352 = vunpack.c.l.b16 %v268
        %v353 = vunpack.c.l.b16 %v269
        %v354 = vunpack.c.l.b16 %v270
        %v355 = vunpack.c.l.b16 %v271
        %v356 = vunpack.c.l.b16 %v272
        %v357 = vunpack.c.l.b16 %v273
        %v358 = vpack.c.b16 %v327, %v326
        %v359 = vpack.c.b16 %v329, %v328
        %v360 = vpack.c.b16 %v331, %v330
        %v361 = vpack.c.b16 %v333, %v332
        %v362 = vpack.c.b16 %v335, %v334
        %v363 = vpack.c.b16 %v337, %v336
        %v364 = vpack.c.b16 %v339, %v338
        %v365 = vpack.c.b16 %v341, %v340
        %v366 = vpack.c.b16 %v343, %v342
        %v367 = vpack.c.b16 %v345, %v344
        %v368 = vpack.c.b16 %v347, %v346
        %v369 = vpack.c.b16 %v349, %v348
        %v370 = vpack.c.b16 %v351, %v350
        %v371 = vpack.c.b16 %v353, %v352
        %v372 = vpack.c.b16 %v355, %v354
        %v373 = vpack.c.b16 %v357, %v356
        %390 = vmatprep.subr.bf16.mxu0 0
        %391 = vmatpush1.bf16.msra.mxu0 %v358
        %392 = vmatprep.subr.bf16.mxu0 0
        %393 = vmatpush1.bf16.msra.mxu0 %v359
        %394 = vmatprep.subr.bf16.mxu0 0
        %395 = vmatpush1.bf16.msra.mxu0 %v360
        %396 = vmatprep.subr.bf16.mxu0 0
        %397 = vmatpush1.bf16.msra.mxu0 %v361
        %398 = vmatprep.subr.bf16.mxu0 0
        %399 = vmatpush1.bf16.msra.mxu0 %v362
        %400 = vmatprep.subr.bf16.mxu0 0
        %401 = vmatpush1.bf16.msra.mxu0 %v363
        %402 = vmatprep.subr.bf16.mxu0 0
        %403 = vmatpush1.bf16.msra.mxu0 %v364
        %404 = vmatprep.subr.bf16.mxu0 0
        %405 = vmatpush1.bf16.msra.mxu0 %v365
        %406 = vmatprep.subr.bf16.mxu0 0
        %407 = vmatpush1.bf16.msra.mxu0 %v366
        %408 = vmatprep.subr.bf16.mxu0 0
        %409 = vmatpush1.bf16.msra.mxu0 %v367
        %410 = vmatprep.subr.bf16.mxu0 0
        %411 = vmatpush1.bf16.msra.mxu0 %v368
        %412 = vmatprep.subr.bf16.mxu0 0
        %413 = vmatpush1.bf16.msra.mxu0 %v369
        %414 = vmatprep.subr.bf16.mxu0 0
        %415 = vmatpush1.bf16.msra.mxu0 %v370
        %416 = vmatprep.subr.bf16.mxu0 0
        %417 = vmatpush1.bf16.msra.mxu0 %v371
        %418 = vmatprep.subr.bf16.mxu0 0
        %419 = vmatpush1.bf16.msra.mxu0 %v372
        %420 = vmatprep.subr.bf16.mxu0 0
        %421 = vmatpush1.bf16.msra.mxu0 %v373
        %422 = vmatprep.mubr.bf16.mxu0 %v287
        %423 = vmatmul.mubr.bf16.gmra.mrb[0].mxu0 %v286
        %v424 = vpop.f32.mrb[0].mxu0
        %v425 = vadd.f32 0.0, %v424
        %v426 = vpop.f32.mrb[0].mxu0
        %v427 = vpop.f32.mrb[0].mxu0
        %v428 = vadd.f32 0.0, %v427
        %v429 = vpop.f32.mrb[0].mxu0
        %430 = vmatprep.mubr.bf16.mxu0 %v289
        %431 = vmatmul.mubr.bf16.gmra.mrb[0].mxu0 %v288
        %v432 = vpop.f32.mrb[0].mxu0
        %v433 = vadd.f32 0.0, %v432
        %v434 = vpop.f32.mrb[0].mxu0
        %v435 = vpop.f32.mrb[0].mxu0
        %v436 = vadd.f32 0.0, %v435
        %v437 = vpop.f32.mrb[0].mxu0
        %438 = vdwg.mxu0
        %v439 = vadd.f32 %v234, %v425
        %v440 = vadd.f32 %v235, %v428
        %v441 = vadd.f32 %v236, %v433
        %v442 = vadd.f32 %v237, %v436
        %443 = vst [vmem:[#allocation2] sm:$0xff] %v439
        %444 = vst [vmem:[#allocation2 + $0x8] sm:$0xff] %v440
        %445 = vst [vmem:[#allocation2 + $0x10] sm:$0xff] %v441
        %446 = vst [vmem:[#allocation2 + $0x18] sm:$0xff] %v442
        // Predicated region
        $region37: #{a_call__.1} parent=31 // pred_check
          %p447 = pneg %p226
        $region38: #{a_call__.1} parent=31 // pred_check_branch
          %449 = sbr.rel (%p447) target = $region40
        $region39: #{a_call__.1} parent=31 // pred_region
          %v450 = vld [vmem:[#allocation2] sm:$0xff]
          %v451 = vld [vmem:[#allocation2 + $0x8] sm:$0xff]
          %v452 = vld [vmem:[#allocation2 + $0x10] sm:$0xff]
          %v453 = vld [vmem:[#allocation2 + $0x18] sm:$0xff]
          %v454 = vld [vmem:[%s2] sm:$0x1]
          %v456 = vlaneseq
          %v457 = vshrl.u32 %v456, 7
          %v458 = vsub.s32 0, %v457
          %v459 = vrot.slane %v454, %v458
          %v461 = vadd.f32 %v450, %v459
          %v462 = vadd.f32 %v451, %v459
          %v463 = vadd.f32 %v452, %v459
          %v464 = vadd.f32 %v453, %v459
          %v465 = vpack.c.bf16 %v462, %v461
          %v466 = vpack.c.bf16 %v464, %v463
          %v469 = vunpack.c.l.b16 %v465
          %v470 = vunpack.c.h.b16 %v465
          %v471 = vunpack.c.l.b16 %v466
          %v472 = vunpack.c.h.b16 %v466
          %v473 = vpack.c.b16 %v469, %v469
          %v474 = vpack.c.b16 %v470, %v470
          %v475 = vpack.c.b16 %v471, %v471
          %v476 = vpack.c.b16 %v472, %v472
          %481 = vst [vmem:[%s205] sm:$0xf] %v473
          %482 = vst [vmem:[%s205 + $0x4] sm:$0xf] %v474
          %483 = vst [vmem:[%s205 + $0x8] sm:$0xf] %v475
          %484 = vst [vmem:[%s205 + $0xc] sm:$0xf] %v476
        $region40: #{a_call__.1} parent=31 // pred_fallthru
          _
        %s485 = sand.u32 %s112, 1
        %s486 = scalar_lea.sflag [#allocation4], %s485
        %s487 = sand.u32 %s112, 1
        %s488 = smul.addr %s487, 16
        %s489 = scalar_lea.vmem [#allocation3], %s488
        // Predicated region
        $region41: #{a_call__.1} parent=31 // pred_check
          %p490 = pneg %p122
        $region42: #{a_call__.1} parent=31 // pred_check_branch
          %492 = sbr.rel (%p490) target = $region44
        $region43: #{a_call__.1} parent=31 // pred_region
          %s493 = smul.u32 4, %s21
          %s495 = ssub.s32 256, 256
          %496 = vsyncadd %s486, %s495
          %s497 = smul.addr %s493, 64
          %s498 = scalar_lea.hbm %s3, %s497
          %s499 = sshll.u32 %s489, 4
          %s500 = int_to_ptr.vmem [resolvable:$true] %s499
          %505 = dma.vmem_to_hbm [thread:$0]  %s500, 256, %s498, %s486, 64, 64, 4
        $region44: #{a_call__.1} parent=31 // pred_fallthru
          _
      $region32: #{a_call__.1} parent=5 // pred_fallthru
        _
      %p506 = scmp.le.s32.totalorder 2, %s12
      // Predicated region
      $region45: #{a_call__.1} parent=5 // pred_check
        %p507 = pneg %p506
      $region46: #{a_call__.1} parent=5 // pred_check_branch
        %509 = sbr.rel (%p507) target = $region48
      $region47: #{a_call__.1} parent=5 // pred_region
        %s510 = ssub.s32 %s12, 2
        // Predicated region
        $region49: #{a_call__.1} parent=47 // pred_check
          %p511 = pneg %p128
        $region50: #{a_call__.1} parent=47 // pred_check_branch
          %513 = sbr.rel (%p511) target = $region52
        $region51: #{a_call__.1} parent=47 // pred_region
          %s514 = sand.u32 %s113, 1
          %s515 = scalar_lea.sflag [#allocation4], %s514
          %s516 = sand.u32 %s113, 1
          %s517 = smul.addr %s516, 16
          %s518 = scalar_lea.vmem [#allocation3], %s517
          %519 = dma.done %s515, 256
        $region52: #{a_call__.1} parent=47 // pred_fallthru
          _
      $region48: #{a_call__.1} parent=5 // pred_fallthru
        _
    $region6: #{a_call__.1} parent=1 // loop_footer
      %s16 = sadd.s32 1, %s12
    $region7: #{a_call__.1} parent=1 // loop_footer_branch
      %11 = sbr.rel target = $region3
    $region8: #{a_call__.1} parent=1 // loop_exit
      _
    %520 = vsyncpa [#allocation4], 1
    %s521 = scalar_lea.sflag [#allocation4], 1
    %522 = vsyncpa %s521, 1

</llo_original>
